<compile_context>
chip_gen: v7x
topology: tpu7x:2x2x1
jax: 0.10.0
libtpu: 0.0.40
codegen_flags: <defaults>
</compile_context>

<pallas_src>
import functools

import jax
import jax.numpy as jnp
from jax import lax
from jax.experimental import pallas as pl
from jax.experimental.pallas import tpu as pltpu


def _ce_kernel(labels_ref, *refs, weights, ignore_label, hw, tile_hw):
    """Grid: (N, num_pixel_tiles).  Blocks:
         labels_ref : (1, 1, T) int32
         pred refs  : (1, C, T) input dtype   (one per head)
       Outputs (written only on last step): loss_sum (1,1), valid_cnt (1,1).
       Scratch: acc_loss (1, T) f32, acc_cnt (1, T) f32 (persist across grid).
    """
    n_heads = len(weights)
    pred_refs = refs[:n_heads]
    sum_ref, cnt_ref = refs[n_heads], refs[n_heads + 1]
    acc_loss, acc_cnt = refs[n_heads + 2], refs[n_heads + 3]

    n_i = pl.program_id(0)
    t_i = pl.program_id(1)
    is_first = (n_i == 0) & (t_i == 0)
    is_last = ((n_i == pl.num_programs(0) - 1)
               & (t_i == pl.num_programs(1) - 1))

    @pl.when(is_first)
    def _():
        acc_loss[...] = jnp.zeros_like(acc_loss)
        acc_cnt[...] = jnp.zeros_like(acc_cnt)

    lab = labels_ref[0]                                       # (1, T) int32
    lane = lax.broadcasted_iota(jnp.int32, lab.shape, 1)      # (1, T)
    in_range = (t_i * tile_hw + lane) < hw                    # mask padded tail
    valid = (lab != ignore_label) & in_range                  # (1, T) bool

    # Weighted per-pixel CE summed over heads (all heads share `valid`).
    tile_loss = jnp.zeros(lab.shape, jnp.float32)
    for pred_ref, w in zip(pred_refs, weights):
        x = pred_ref[0].astype(jnp.float32)                   # (C, T)
        m = jnp.max(x, axis=0, keepdims=True)                 # (1, T)
        xm = x - m                                            # reused below
        lse = jnp.log(jnp.sum(jnp.exp(xm), axis=0, keepdims=True))   # (1, T)
        cls_ids = lax.broadcasted_iota(jnp.int32, x.shape, 0)         # (C, T)
        tgt = jnp.sum(jnp.where(cls_ids == lab, xm, 0.0),
                      axis=0, keepdims=True)                  # (1, T)
        tile_loss = tile_loss + w * (lse - tgt)

    acc_loss[...] += jnp.where(valid, tile_loss, 0.0)
    acc_cnt[...] += valid.astype(jnp.float32)

    @pl.when(is_last)
    def _():
        sum_ref[...] = jnp.sum(acc_loss[...]).reshape(1, 1)
        cnt_ref[...] = jnp.sum(acc_cnt[...]).reshape(1, 1)


def _pick_tile_hw(hw, c, n_heads, itemsize, tile_hint=2048):
    """Largest 128-multiple pixel tile <= hint that fits a conservative VMEM
    budget (double-buffered inputs + resident accumulators), or the full pixel
    row when it is smaller than the tile (always a legal block)."""
    per_px = 2 * (n_heads * c * itemsize + 4) + 2 * 4   # preds + labels + acc
    vmem_budget = 8 * 1024 * 1024                       # safe on v5e/v6e/v7x
    t = min(int(tile_hint), max(128, vmem_budget // per_px))
    t = max(128, (t // 128) * 128)
    if hw <= t:
        return hw
    return t


def _cross_entropy_fused(preds_list, labels, weights, ignore_label=255,
                         tile_hw_hint=2048):
    """preds_list: list of [N, C, H, W] (same shape); labels: [N, H, W].
    Returns (sum_i w_i * sum_loss_i) / valid_count  == sum_i w_i * mean_CE_i.
    """
    N, C, H, W = preds_list[0].shape
    HW = H * W
    n_heads = len(preds_list)

    # Free reshapes only (no transpose, no pad): pixels land on the lane axis.
    xs = [p.reshape(N, C, HW) for p in preds_list]
    y = labels.reshape(N, 1, HW).astype(jnp.int32)

    itemsize = jnp.dtype(preds_list[0].dtype).itemsize
    tile_hw = _pick_tile_hw(HW, C, n_heads, itemsize, tile_hw_hint)
    grid = (N, pl.cdiv(HW, tile_hw))

    kernel = functools.partial(
        _ce_kernel,
        weights=tuple(float(w) for w in weights),
        ignore_label=int(ignore_label),
        hw=HW,
        tile_hw=tile_hw,
    )

    pred_spec = pl.BlockSpec((1, C, tile_hw), lambda n, t: (n, 0, t))
    lab_spec = pl.BlockSpec((1, 1, tile_hw), lambda n, t: (n, 0, t))
    scalar_spec = pl.BlockSpec((1, 1), lambda n, t: (0, 0))

    loss_sum, valid_cnt = pl.pallas_call(
        kernel,
        out_shape=(
            jax.ShapeDtypeStruct((1, 1), jnp.float32),
            jax.ShapeDtypeStruct((1, 1), jnp.float32),
        ),
        grid_spec=pltpu.PrefetchScalarGridSpec(
            num_scalar_prefetch=0,
            grid=grid,
            in_specs=[lab_spec] + [pred_spec] * n_heads,
            out_specs=(scalar_spec, scalar_spec),
            scratch_shapes=[
                pltpu.VMEM((1, tile_hw), jnp.float32),   # acc_loss
                pltpu.VMEM((1, tile_hw), jnp.float32),   # acc_cnt
            ],
        ),
        compiler_params=pltpu.CompilerParams(
            dimension_semantics=("arbitrary", "arbitrary")),
    )(y, *xs)

    # reduction='mean' with ignore_index: mean over valid pixels only.
    # (All-ignored input yields NaN, matching PyTorch.)
    return loss_sum[0, 0] / valid_cnt[0, 0]


def cross_entropy_forward(preds, labels, ignore_label=255,
                          aux_weights=(1.0, 0.4, 0.4)):
    """Mirrors CrossEntropy.forward: preds is a single tensor or a tuple."""
    if isinstance(preds, tuple):
        heads = list(zip(preds, aux_weights))
        if heads and all(p.shape == heads[0][0].shape for p, _ in heads):
            # Fused path: labels read once, one launch / pipeline fill-drain.
            return _cross_entropy_fused([p for p, _ in heads], labels,
                                        [w for _, w in heads], ignore_label)
        total = 0.0
        for p, w in heads:
            total = total + w * _cross_entropy_fused([p], labels, [1.0],
                                                     ignore_label)
        return total
    return _cross_entropy_fused([preds], labels, [1.0], ignore_label)


def _reference_ce(preds, labels, ignore_label=255):
    """Pure-JAX reference (nn.CrossEntropyLoss semantics)."""
    N, C, H, W = preds.shape
    x = jnp.transpose(preds, (0, 2, 3, 1)).reshape(-1, C).astype(jnp.float32)
    y = labels.reshape(-1).astype(jnp.int32)
    logp = jax.nn.log_softmax(x, axis=-1)
    valid = y != ignore_label
    y_safe = jnp.where(valid, y, 0)
    nll = -jnp.take_along_axis(logp, y_safe[:, None], axis=-1)[:, 0]
    nll = jnp.where(valid, nll, 0.0)
    return jnp.sum(nll) / jnp.sum(valid.astype(jnp.float32))


if __name__ == "__main__":
    key = jax.random.PRNGKey(0)
    k1, k2, k3, k4, k5, k6, k7 = jax.random.split(key, 7)

    N, C, H, W = 2, 4, 16, 16
    ignore_label = 255

    preds_main = jax.random.normal(k1, (N, C, H, W), dtype=jnp.float32)
    preds_aux1 = jax.random.normal(k2, (N, C, H, W), dtype=jnp.float32)
    preds_aux2 = jax.random.normal(k3, (N, C, H, W), dtype=jnp.float32)

    labels = jax.random.randint(k4, (N, H, W), 0, C, dtype=jnp.int32)
    ignore_mask = jax.random.bernoulli(k5, 0.1, (N, H, W))
    labels = jnp.where(ignore_mask, ignore_label, labels)

    # single-tensor path
    loss_single = cross_entropy_forward(preds_main, labels,
                                        ignore_label=ignore_label)
    # tuple path with aux weights (fused into one pallas_call)
    loss_tuple = cross_entropy_forward(
        (preds_main, preds_aux1, preds_aux2), labels,
        ignore_label=ignore_label, aux_weights=(1.0, 0.4, 0.4))

    jax.block_until_ready(loss_single)
    jax.block_until_ready(loss_tuple)

    ref_single = _reference_ce(preds_main, labels, ignore_label)
    ref_tuple = (1.0 * _reference_ce(preds_main, labels, ignore_label)
                 + 0.4 * _reference_ce(preds_aux1, labels, ignore_label)
                 + 0.4 * _reference_ce(preds_aux2, labels, ignore_label))
    assert jnp.allclose(loss_single, ref_single, atol=1e-5, rtol=1e-5)
    assert jnp.allclose(loss_tuple, ref_tuple, atol=1e-5, rtol=1e-5)

    # secondary check: multi-tile accumulation + padded tail masking
    # (H*W = 576 with a 128-pixel tile -> 5 tiles, last one partially OOB)
    N2, C2, H2, W2 = 1, 5, 24, 24
    preds2 = jax.random.normal(k6, (N2, C2, H2, W2), dtype=jnp.float32)
    labels2 = jax.random.randint(k7, (N2, H2, W2), 0, C2, dtype=jnp.int32)
    labels2 = labels2.at[0, 0, :3].set(ignore_label)
    loss2 = _cross_entropy_fused([preds2], labels2, [1.0],
                                 ignore_label=ignore_label, tile_hw_hint=128)
    jax.block_until_ready(loss2)
    ref2 = _reference_ce(preds2, labels2, ignore_label)
    assert jnp.allclose(loss2, ref2, atol=1e-5, rtol=1e-5)

    print("KERNEL_OK")
</pallas_src>

<mosaic_0001>
module attributes {stable_mosaic.version = 11 : i64} {
  func.func @_ce_kernel(%arg0: i32, %arg1: i32, %arg2: memref<1x1x256xi32, #tpu.memory_space<vmem>>, %arg3: memref<1x4x256xf32, #tpu.memory_space<vmem>>, %arg4: memref<1x1xf32, #tpu.memory_space<vmem>>, %arg5: memref<1x1xf32, #tpu.memory_space<vmem>>, %arg6: memref<1x256xf32, #tpu.memory_space<vmem>>, %arg7: memref<1x256xf32, #tpu.memory_space<vmem>>) attributes {dimension_semantics = [#tpu.dimension_semantics<arbitrary>, #tpu.dimension_semantics<arbitrary>], iteration_bounds = array<i64: 2, 1>, scalar_prefetch = 0 : i64, scratch_operands = 2 : i64, tpu.core_type = #tpu.core_type<tc>, window_params = [{transform_indices = @transform_0, window_bounds = array<i64: 1, 1, 256>}, {transform_indices = @transform_1, window_bounds = array<i64: 1, 4, 256>}, {pipeline_mode = #tpu.pipeline_mode<synchronous>, transform_indices = @transform_2, window_bounds = array<i64: 1, 1>}, {pipeline_mode = #tpu.pipeline_mode<synchronous>, transform_indices = @transform_3, window_bounds = array<i64: 1, 1>}]} {
    %c0_i32 = arith.constant 0 : i32
    %0 = arith.cmpi eq, %arg0, %c0_i32 : i32
    %c0_i32_0 = arith.constant 0 : i32
    %1 = arith.cmpi eq, %arg1, %c0_i32_0 : i32
    %2 = arith.andi %0, %1 : i1
    %c1_i32 = arith.constant 1 : i32
    %3 = arith.cmpi eq, %arg0, %c1_i32 : i32
    %c0_i32_1 = arith.constant 0 : i32
    %4 = arith.cmpi eq, %arg1, %c0_i32_1 : i32
    %5 = arith.andi %3, %4 : i1
    %6 = arith.extui %2 : i1 to i32
    %c0_i32_2 = arith.constant 0 : i32
    %7 = arith.cmpi ne, %6, %c0_i32_2 : i32
    scf.if %7 {
      %cst_24 = arith.constant 0.000000e+00 : f32
      %53 = vector.broadcast %cst_24 : f32 to vector<1x256xf32>
      %c0_25 = arith.constant 0 : index
      %c0_26 = arith.constant 0 : index
      %54 = vector.load %arg6[%c0_25, %c0_26] : memref<1x256xf32, #tpu.memory_space<vmem>>, vector<1x256xf32>
      tpu.vector_store %arg6[%c0_25, %c0_26], %53 {strides = array<i32>} : memref<1x256xf32, #tpu.memory_space<vmem>>, vector<1x256xf32>,
      %cst_27 = arith.constant 0.000000e+00 : f32
      %55 = vector.broadcast %cst_27 : f32 to vector<1x256xf32>
      %c0_28 = arith.constant 0 : index
      %c0_29 = arith.constant 0 : index
      %56 = vector.load %arg7[%c0_28, %c0_29] : memref<1x256xf32, #tpu.memory_space<vmem>>, vector<1x256xf32>
      tpu.vector_store %arg7[%c0_28, %c0_29], %55 {strides = array<i32>} : memref<1x256xf32, #tpu.memory_space<vmem>>, vector<1x256xf32>,
    } else {
    }
    %c0 = arith.constant 0 : index
    %c0_3 = arith.constant 0 : index
    %c0_4 = arith.constant 0 : index
    %8 = vector.load %arg2[%c0, %c0_3, %c0_4] : memref<1x1x256xi32, #tpu.memory_space<vmem>>, vector<1x1x256xi32>
    %9 = vector.shape_cast %8 : vector<1x1x256xi32> to vector<1x256xi32>
    %10 = tpu.iota {dimensions = array<i32: 1>} : vector<1x256xi32>
    %c256_i32 = arith.constant 256 : i32
    %11 = arith.muli %arg1, %c256_i32 : i32
    %12 = vector.broadcast %11 : i32 to vector<1x256xi32>
    %13 = arith.addi %12, %10 : vector<1x256xi32>
    %c256_i32_5 = arith.constant 256 : i32
    %14 = vector.broadcast %c256_i32_5 : i32 to vector<1x256xi32>
    %15 = arith.cmpi slt, %13, %14 : vector<1x256xi32>
    %c255_i32 = arith.constant 255 : i32
    %16 = vector.broadcast %c255_i32 : i32 to vector<1x256xi32>
    %17 = arith.cmpi ne, %9, %16 : vector<1x256xi32>
    %18 = arith.andi %17, %15 : vector<1x256xi1>
    %cst = arith.constant 0.000000e+00 : f32
    %19 = vector.broadcast %cst : f32 to vector<1x256xf32>
    %c0_6 = arith.constant 0 : index
    %c0_7 = arith.constant 0 : index
    %c0_8 = arith.constant 0 : index
    %20 = vector.load %arg3[%c0_6, %c0_7, %c0_8] : memref<1x4x256xf32, #tpu.memory_space<vmem>>, vector<1x4x256xf32>
    %21 = vector.shape_cast %20 : vector<1x4x256xf32> to vector<4x256xf32>
    %cst_9 = arith.constant dense<0xFF800000> : vector<256xf32>
    %22 = vector.multi_reduction <maximumf>, %21, %cst_9 [0] : vector<4x256xf32> to vector<256xf32>
    %23 = vector.shape_cast %22 : vector<256xf32> to vector<1x256xf32>
    %24 = vector.broadcast %23 : vector<1x256xf32> to vector<4x256xf32>
    %25 = arith.subf %21, %24 : vector<4x256xf32>
    %26 = math.exp %25 : vector<4x256xf32>
    %cst_10 = arith.constant dense<0.000000e+00> : vector<256xf32>
    %27 = vector.multi_reduction <add>, %26, %cst_10 [0] : vector<4x256xf32> to vector<256xf32>
    %28 = vector.shape_cast %27 : vector<256xf32> to vector<1x256xf32>
    %29 = math.log %28 : vector<1x256xf32>
    %30 = tpu.iota {dimensions = array<i32: 0>} : vector<4x256xi32>
    %31 = vector.broadcast %9 : vector<1x256xi32> to vector<4x256xi32>
    %32 = arith.cmpi eq, %30, %31 : vector<4x256xi32>
    %cst_11 = arith.constant 0.000000e+00 : f32
    %33 = vector.broadcast %cst_11 : f32 to vector<4x256xf32>
    %34 = arith.select %32, %25, %33 : vector<4x256xi1>, vector<4x256xf32>
    %cst_12 = arith.constant dense<0.000000e+00> : vector<256xf32>
    %35 = vector.multi_reduction <add>, %34, %cst_12 [0] : vector<4x256xf32> to vector<256xf32>
    %36 = vector.shape_cast %35 : vector<256xf32> to vector<1x256xf32>
    %37 = arith.subf %29, %36 : vector<1x256xf32>
    %cst_13 = arith.constant 1.000000e+00 : f32
    %38 = vector.broadcast %cst_13 : f32 to vector<1x256xf32>
    %39 = arith.mulf %38, %37 : vector<1x256xf32>
    %40 = arith.addf %19, %39 : vector<1x256xf32>
    %c0_14 = arith.constant 0 : index
    %c0_15 = arith.constant 0 : index
    %41 = vector.load %arg6[%c0_14, %c0_15] : memref<1x256xf32, #tpu.memory_space<vmem>>, vector<1x256xf32>
    %cst_16 = arith.constant 0.000000e+00 : f32
    %42 = vector.broadcast %cst_16 : f32 to vector<1x256xf32>
    %43 = arith.select %18, %40, %42 : vector<1x256xi1>, vector<1x256xf32>
    %44 = arith.addf %41, %43 : vector<1x256xf32>
    %c0_17 = arith.constant 0 : index
    %c0_18 = arith.constant 0 : index
    %45 = vector.load %arg6[%c0_17, %c0_18] : memref<1x256xf32, #tpu.memory_space<vmem>>, vector<1x256xf32>
    tpu.vector_store %arg6[%c0_17, %c0_18], %44 {strides = array<i32>} : memref<1x256xf32, #tpu.memory_space<vmem>>, vector<1x256xf32>,
    %c0_19 = arith.constant 0 : index
    %c0_20 = arith.constant 0 : index
    %46 = vector.load %arg7[%c0_19, %c0_20] : memref<1x256xf32, #tpu.memory_space<vmem>>, vector<1x256xf32>
    %47 = arith.extui %18 : vector<1x256xi1> to vector<1x256xi32>
    %48 = arith.sitofp %47 : vector<1x256xi32> to vector<1x256xf32>
    %49 = arith.addf %46, %48 : vector<1x256xf32>
    %c0_21 = arith.constant 0 : index
    %c0_22 = arith.constant 0 : index
    %50 = vector.load %arg7[%c0_21, %c0_22] : memref<1x256xf32, #tpu.memory_space<vmem>>, vector<1x256xf32>
    tpu.vector_store %arg7[%c0_21, %c0_22], %49 {strides = array<i32>} : memref<1x256xf32, #tpu.memory_space<vmem>>, vector<1x256xf32>,
    %51 = arith.extui %5 : i1 to i32
    %c0_i32_23 = arith.constant 0 : i32
    %52 = arith.cmpi ne, %51, %c0_i32_23 : i32
    scf.if %52 {
      %c0_24 = arith.constant 0 : index
      %c0_25 = arith.constant 0 : index
      %53 = vector.load %arg6[%c0_24, %c0_25] : memref<1x256xf32, #tpu.memory_space<vmem>>, vector<1x256xf32>
      %54 = vector.shape_cast %53 : vector<1x256xf32> to vector<1x1x256xf32>
      %cst_26 = arith.constant dense<0.000000e+00> : vector<1xf32>
      %55 = vector.multi_reduction <add>, %54, %cst_26 [1, 2] : vector<1x1x256xf32> to vector<1xf32>
      %56 = vector.shape_cast %55 : vector<1xf32> to vector<1x1x1xf32>
      %57 = vector.extract %56[0, 0, 0] : f32 from vector<1x1x1xf32>
      %58 = vector.broadcast %57 : f32 to vector<1x1xf32>
      %c0_27 = arith.constant 0 : index
      %c0_28 = arith.constant 0 : index
      %59 = vector.load %arg4[%c0_27, %c0_28] : memref<1x1xf32, #tpu.memory_space<vmem>>, vector<1x1xf32>
      tpu.vector_store %arg4[%c0_27, %c0_28], %58 {strides = array<i32>} : memref<1x1xf32, #tpu.memory_space<vmem>>, vector<1x1xf32>,
      %c0_29 = arith.constant 0 : index
      %c0_30 = arith.constant 0 : index
      %60 = vector.load %arg7[%c0_29, %c0_30] : memref<1x256xf32, #tpu.memory_space<vmem>>, vector<1x256xf32>
      %61 = vector.shape_cast %60 : vector<1x256xf32> to vector<1x1x256xf32>
      %cst_31 = arith.constant dense<0.000000e+00> : vector<1xf32>
      %62 = vector.multi_reduction <add>, %61, %cst_31 [1, 2] : vector<1x1x256xf32> to vector<1xf32>
      %63 = vector.shape_cast %62 : vector<1xf32> to vector<1x1x1xf32>
      %64 = vector.extract %63[0, 0, 0] : f32 from vector<1x1x1xf32>
      %65 = vector.broadcast %64 : f32 to vector<1x1xf32>
      %c0_32 = arith.constant 0 : index
      %c0_33 = arith.constant 0 : index
      %66 = vector.load %arg5[%c0_32, %c0_33] : memref<1x1xf32, #tpu.memory_space<vmem>>, vector<1x1xf32>
      tpu.vector_store %arg5[%c0_32, %c0_33], %65 {strides = array<i32>} : memref<1x1xf32, #tpu.memory_space<vmem>>, vector<1x1xf32>,
    } else {
    }
    return
  }
  func.func @transform_0(%arg0: i32, %arg1: i32) -> (i32, i32, i32) {
    %c0_i32 = arith.constant 0 : i32
    %c0_i32_0 = arith.constant 0 : i32
    return %arg0, %c0_i32, %arg1 : i32, i32, i32
  }
  func.func @transform_1(%arg0: i32, %arg1: i32) -> (i32, i32, i32) {
    %c0_i32 = arith.constant 0 : i32
    %c0_i32_0 = arith.constant 0 : i32
    return %arg0, %c0_i32, %arg1 : i32, i32, i32
  }
  func.func @transform_2(%arg0: i32, %arg1: i32) -> (i32, i32) {
    %c0_i32 = arith.constant 0 : i32
    %c0_i32_0 = arith.constant 0 : i32
    %c0_i32_1 = arith.constant 0 : i32
    return %c0_i32, %c0_i32_0 : i32, i32
  }
  func.func @transform_3(%arg0: i32, %arg1: i32) -> (i32, i32) {
    %c0_i32 = arith.constant 0 : i32
    %c0_i32_0 = arith.constant 0 : i32
    %c0_i32_1 = arith.constant 0 : i32
    return %c0_i32, %c0_i32_0 : i32, i32
  }
}

</mosaic_0001>

<llo_original>
// kernel: tpu_custom_call.1
$region0: #{tpu_custom_call.1}
  #allocation0 [shape = 'u32[]', space=smem, size = 0x4, offset = 0x4, fixed_abs, tag = 'smem constant byte address 0x4 - core index']
  #allocation1 [shape = 'u32[144,128]{1,0:T(1,128)}', space=vmem, size = 0x12000, scoped, tag = 'internal scratch']
  #allocation2 [shape = 'f32[1,256]{1,0:T(1,128)}', space=vmem, size = 0x400, scoped, tag = 'scratch operand']
  #allocation3 [shape = 'f32[1,256]{1,0:T(1,128)}', space=vmem, size = 0x400, scoped, tag = 'scratch operand']
  %s0 = inlined_call_operand.hbm [shape: s32[2,1,256], index: 0, kind: input, shape index: {}]
  %s1 = inlined_call_operand.hbm [shape: f32[2,4,256], index: 1, kind: input, shape index: {}]
  %s2 = inlined_call_operand.hbm [shape: f32[1,1], index: 2, kind: output, shape index: {0}]
  %s3 = inlined_call_operand.hbm [shape: f32[1,1], index: 3, kind: output, shape index: {1}]
  %4 = xla_tuple %s2, %s3
  %s5 = sld [smem:[#allocation0]]
  $region65: #{tpu_custom_call.1} parent=0
    _
  %s7 = ssub.s32 1, %s5
  %s8 = scalar_select 0, %s7, %s5
  $region1: #{tpu_custom_call.1} parent=0
    #allocation4 [shape = 'u8[2048]{0}', space=vmem, size = 0x800, scoped, tag = 'input window, operand 0']
    #allocation5 [shape = 's32[2]{0}', space=sflag, size = 0x8, scoped, tag = 'scoped memory for tpu_custom_call.1']
    #allocation6 [shape = 's32[2]{0}', space=sflag, size = 0x8, scoped, tag = 'scoped memory for tpu_custom_call.1']
    #allocation7 [shape = 'u8[8192]{0}', space=vmem, size = 0x2000, scoped, tag = 'input window, operand 1']
    #allocation8 [shape = 's32[2]{0}', space=sflag, size = 0x8, scoped, tag = 'scoped memory for tpu_custom_call.1']
    #allocation9 [shape = 'u8[512]{0}', space=vmem, size = 0x400, scoped, tag = 'output window, operand 0, single buffered']
    #allocation10 [shape = 'u8[512]{0}', space=vmem, size = 0x400, scoped, tag = 'output window, operand 1, single buffered']
    #allocation11 [shape = 's32[1]{0}', space=sflag, size = 0x4, scoped, tag = 'scoped memory for tpu_custom_call.1']
    %9 = vsyncpa [#allocation5], 0
    %s10 = scalar_lea.sflag [#allocation5], 1
    %11 = vsyncpa %s10, 0
    %12 = vsyncpa [#allocation8], 0
    %s13 = scalar_lea.sflag [#allocation8], 1
    %14 = vsyncpa %s13, 0
    %15 = vsyncpa [#allocation6], 0
    %16 = vsyncpa [#allocation11], 0
    loop: start=0, step=1, limit=4
    $region2: #{tpu_custom_call.1} parent=1 // loop_pre_header
      _
    $region3: #{tpu_custom_call.1} parent=1 // loop_header
      %s18 = sphi 0, %s22
      %p19 = scmp.ge.s32.totalorder %s18, 4
      %s25 = sphi 0, %s37
      %s26 = sphi 0, %s33
      %s27 = sphi 0, %s25
      %s28 = sphi 0, %s26
      %s29 = sphi 0, %s27
      %s30 = sphi 0, %s28
      %s42 = sphi 0, %s44
      %s45 = sphi 0, %s42
      %s46 = sphi 0, %s45
      %s62 = sphi 0, %s46
      %s70 = sphi 0, %s72
      %s73 = sphi 0, %s70
      %s74 = sphi 0, %s73
      %s90 = sphi 0, %s74
      %s94 = sphi 0, %s94
      %s96 = sphi 0, %s94
      %s97 = sphi 0, %s96
      %s111 = sphi 0, %s97
      %s115 = sphi 0, %s115
      %s117 = sphi 0, %s115
      %s118 = sphi 0, %s117
      %s132 = sphi 0, %s118
    $region4: #{tpu_custom_call.1} parent=1 // loop_header_branch
      %21 = sbr.rel (%p19) target = $region8
    $region5: #{tpu_custom_call.1} parent=1 // loop_body
      %s23 = ssub.s32 %s18, 1
      %s24 = ssub.s32 %s18, 2
      %s31 = sadd.s32 1, %s26
      %p32 = scmp.ge.s32.totalorder %s31, 1
      %s33 = scalar_select %p32, 0, %s31
      %s34 = sadd.s32 1, %s25
      %s35 = scalar_select %p32, %s34, %s25
      %p36 = scmp.ge.s32.totalorder %s35, 2
      %s37 = scalar_select %p36, 0, %s35
      %s38 = ssub.s32 %s25, %s37
      %s39 = ssub.s32 %s26, %s33
      %s40 = sor.u32 %s38, %s39
      %p41 = scmp.eq.s32.totalorder %s40, 0
      %s43 = sadd.s32 %s42, 1
      %s44 = scalar_select %p41, %s42, %s43
      %p47 = pneg %p41
      %p48 = scmp.eq.s32.totalorder %s18, 1
      %p49 = por %p47, %p48
      %p50 = scmp.ne.s32.totalorder %s42, %s45
      %p51 = scmp.eq.s32.totalorder %s18, 0
      %p52 = por %p50, %p51
      %p53 = scmp.ne.s32.totalorder %s42, %s45
      %p54 = scmp.eq.s32.totalorder %s23, 1
      %p55 = por %p53, %p54
      %p56 = scmp.ne.s32.totalorder %s45, %s46
      %p57 = scmp.eq.s32.totalorder %s23, 0
      %p58 = por %p56, %p57
      %p59 = scmp.ne.s32.totalorder %s45, %s46
      %p60 = scmp.eq.s32.totalorder %s24, 1
      %p61 = por %p59, %p60
      %p63 = scmp.ne.s32.totalorder %s46, %s62
      %p64 = scmp.eq.s32.totalorder %s24, 0
      %p65 = por %p63, %p64
      %s66 = ssub.s32 %s25, %s37
      %s67 = ssub.s32 %s26, %s33
      %s68 = sor.u32 %s66, %s67
      %p69 = scmp.eq.s32.totalorder %s68, 0
      %s71 = sadd.s32 %s70, 1
      %s72 = scalar_select %p69, %s70, %s71
      %p75 = pneg %p69
      %p76 = scmp.eq.s32.totalorder %s18, 1
      %p77 = por %p75, %p76
      %p78 = scmp.ne.s32.totalorder %s70, %s73
      %p79 = scmp.eq.s32.totalorder %s18, 0
      %p80 = por %p78, %p79
      %p81 = scmp.ne.s32.totalorder %s70, %s73
      %p82 = scmp.eq.s32.totalorder %s23, 1
      %p83 = por %p81, %p82
      %p84 = scmp.ne.s32.totalorder %s73, %s74
      %p85 = scmp.eq.s32.totalorder %s23, 0
      %p86 = por %p84, %p85
      %p87 = scmp.ne.s32.totalorder %s73, %s74
      %p88 = scmp.eq.s32.totalorder %s24, 1
      %p89 = por %p87, %p88
      %p91 = scmp.ne.s32.totalorder %s74, %s90
      %p92 = scmp.eq.s32.totalorder %s24, 0
      %p93 = por %p91, %p92
      %s95 = sadd.s32 %s94, 1
      %p98 = scmp.eq.s32.totalorder %s18, 1
      %p99 = scmp.ne.s32.totalorder %s94, %s96
      %p100 = scmp.eq.s32.totalorder %s18, 0
      %p101 = por %p99, %p100
      %p102 = scmp.ne.s32.totalorder %s94, %s96
      %p103 = scmp.eq.s32.totalorder %s23, 1
      %p104 = por %p102, %p103
      %p105 = scmp.ne.s32.totalorder %s96, %s97
      %p106 = scmp.eq.s32.totalorder %s23, 0
      %p107 = por %p105, %p106
      %p108 = scmp.ne.s32.totalorder %s96, %s97
      %p109 = scmp.eq.s32.totalorder %s24, 1
      %p110 = por %p108, %p109
      %p112 = scmp.ne.s32.totalorder %s97, %s111
      %p113 = scmp.eq.s32.totalorder %s24, 0
      %p114 = por %p112, %p113
      %s116 = sadd.s32 %s115, 1
      %p119 = scmp.eq.s32.totalorder %s18, 1
      %p120 = scmp.ne.s32.totalorder %s115, %s117
      %p121 = scmp.eq.s32.totalorder %s18, 0
      %p122 = por %p120, %p121
      %p123 = scmp.ne.s32.totalorder %s115, %s117
      %p124 = scmp.eq.s32.totalorder %s23, 1
      %p125 = por %p123, %p124
      %p126 = scmp.ne.s32.totalorder %s117, %s118
      %p127 = scmp.eq.s32.totalorder %s23, 0
      %p128 = por %p126, %p127
      %p129 = scmp.ne.s32.totalorder %s117, %s118
      %p130 = scmp.eq.s32.totalorder %s24, 1
      %p131 = por %p129, %p130
      %p133 = scmp.ne.s32.totalorder %s118, %s132
      %p134 = scmp.eq.s32.totalorder %s24, 0
      %p135 = por %p133, %p134
      %p136 = scmp.le.s32.totalorder 1, %s18
      %p137 = scmp.lt.s32.totalorder %s18, 3
      %p138 = pnand %p136, %p137
      %p139 = pneg %p138
      // Predicated region
      $region9: #{tpu_custom_call.1} parent=5 // pred_check
        _
      $region10: #{tpu_custom_call.1} parent=5 // pred_check_branch
        %141 = sbr.rel (%p138) target = $region12
      $region11: #{tpu_custom_call.1} parent=5 // pred_region
        %s142 = ssub.s32 %s18, 1
      $region12: #{tpu_custom_call.1} parent=5 // pred_fallthru
        _
      %p143 = scmp.lt.s32.totalorder %s18, 2
      // Predicated region
      $region13: #{tpu_custom_call.1} parent=5 // pred_check
        %p144 = pneg %p143
      $region14: #{tpu_custom_call.1} parent=5 // pred_check_branch
        %146 = sbr.rel (%p144) target = $region16
      $region15: #{tpu_custom_call.1} parent=5 // pred_region
        // Predicated region
        $region17: #{tpu_custom_call.1} parent=15 // pred_check
          %p147 = pneg %p52
        $region18: #{tpu_custom_call.1} parent=15 // pred_check_branch
          %149 = sbr.rel (%p147) target = $region20
        $region19: #{tpu_custom_call.1} parent=15 // pred_region
          %s150 = sand.u32 %s42, 1
          %s151 = scalar_lea.sflag [#allocation5], %s150
          %s152 = sand.u32 %s42, 1
          %s153 = smul.addr %s152, 2
          %s154 = scalar_lea.vmem [#allocation4], %s153
          %s155 = smul.u32 2, %s26
          %s157 = ssub.s32 32, 32
          %158 = vsyncadd %s151, %s157
          %s159 = smul.addr %s25, 2
          %s160 = sadd.s32 %s155, %s159
          %s161 = smul.addr %s160, 16
          %s162 = scalar_lea.hbm %s0, %s161
          %s164 = sshll.u32 %s154, 4
          %s165 = int_to_ptr.vmem [resolvable:$true] %s164
          %167 = dma.hbm_to_vmem [thread:$0]  %s162, 32, %s165, %s151
        $region20: #{tpu_custom_call.1} parent=15 // pred_fallthru
          _
        // Predicated region
        $region21: #{tpu_custom_call.1} parent=15 // pred_check
          %p168 = pneg %p80
        $region22: #{tpu_custom_call.1} parent=15 // pred_check_branch
          %170 = sbr.rel (%p168) target = $region24
        $region23: #{tpu_custom_call.1} parent=15 // pred_region
          %s171 = sand.u32 %s70, 1
          %s172 = scalar_lea.sflag [#allocation8], %s171
          %s173 = sand.u32 %s70, 1
          %s174 = smul.addr %s173, 8
          %s175 = scalar_lea.vmem [#allocation7], %s174
          %s176 = smul.u32 2, %s26
          %s178 = ssub.s32 128, 128
          %179 = vsyncadd %s172, %s178
          %s180 = smul.addr %s25, 2
          %s181 = sadd.s32 %s176, %s180
          %s182 = smul.addr %s181, 64
          %s183 = scalar_lea.hbm %s1, %s182
          %s185 = sshll.u32 %s175, 4
          %s186 = int_to_ptr.vmem [resolvable:$true] %s185
          %188 = dma.hbm_to_vmem [thread:$0]  %s183, 128, %s186, %s172
        $region24: #{tpu_custom_call.1} parent=15 // pred_fallthru
          _
      $region16: #{tpu_custom_call.1} parent=5 // pred_fallthru
        _
      %p189 = scmp.le.s32.totalorder 1, %s18
      %p190 = scmp.lt.s32.totalorder %s18, 3
      %p191 = pnand %p189, %p190
      %p192 = pneg %p191
      // Predicated region
      $region25: #{tpu_custom_call.1} parent=5 // pred_check
        _
      $region26: #{tpu_custom_call.1} parent=5 // pred_check_branch
        %194 = sbr.rel (%p191) target = $region28
      $region27: #{tpu_custom_call.1} parent=5 // pred_region
        %s195 = ssub.s32 %s18, 1
        %s196 = sand.u32 %s45, 1
        %s197 = scalar_lea.sflag [#allocation5], %s196
        %s198 = sand.u32 %s45, 1
        %s199 = smul.addr %s198, 2
        %s200 = scalar_lea.vmem [#allocation4], %s199
        // Predicated region
        $region29: #{tpu_custom_call.1} parent=27 // pred_check
          %p201 = pneg %p58
        $region30: #{tpu_custom_call.1} parent=27 // pred_check_branch
          %203 = sbr.rel (%p201) target = $region32
        $region31: #{tpu_custom_call.1} parent=27 // pred_region
          %204 = dma.done %s197, 32
        $region32: #{tpu_custom_call.1} parent=27 // pred_fallthru
          _
        %s205 = sand.u32 %s73, 1
        %s206 = scalar_lea.sflag [#allocation8], %s205
        %s207 = sand.u32 %s73, 1
        %s208 = smul.addr %s207, 8
        %s209 = scalar_lea.vmem [#allocation7], %s208
        // Predicated region
        $region33: #{tpu_custom_call.1} parent=27 // pred_check
          %p210 = pneg %p86
        $region34: #{tpu_custom_call.1} parent=27 // pred_check_branch
          %212 = sbr.rel (%p210) target = $region36
        $region35: #{tpu_custom_call.1} parent=27 // pred_region
          %213 = dma.done %s206, 128
        $region36: #{tpu_custom_call.1} parent=27 // pred_fallthru
          _
        %s214 = sand.u32 %s45, 1
        %s215 = scalar_lea.sflag [#allocation5], %s214
        %s216 = sand.u32 %s45, 1
        %s217 = smul.addr %s216, 2
        %s218 = scalar_lea.vmem [#allocation4], %s217
        %p219 = pneg %p58
        %p220 = pneg %p55
        %s221 = sand.u32 %s73, 1
        %s222 = scalar_lea.sflag [#allocation8], %s221
        %s223 = sand.u32 %s73, 1
        %s224 = smul.addr %s223, 8
        %s225 = scalar_lea.vmem [#allocation7], %s224
        %p226 = pneg %p86
        %p227 = pneg %p83
        %p228 = pneg %p107
        %p229 = pneg %p104
        %p230 = pneg %p128
        %p231 = pneg %p125
        %s232 = smul.u32 2, %s28
        %s233 = smul.u32 2, %s28
        %p234 = scmp.eq.s32.totalorder %s27, 0
        %p235 = scmp.eq.s32.totalorder %s28, 0
        %p236 = pnand %p234, %p235
        %p237 = pneg %p236
        %p238 = scmp.eq.s32.totalorder %s27, 1
        %p239 = pnand %p238, %p235
        %p240 = pneg %p239
        // Predicated region
        $region37: #{tpu_custom_call.1} parent=27 // pred_check
          _
        $region38: #{tpu_custom_call.1} parent=27 // pred_check_branch
          %242 = sbr.rel (%p236) target = $region40
        $region39: #{tpu_custom_call.1} parent=27 // pred_region
          %v243 = vlaneseq
          %vm244 = vcmp.ge.s32.totalorder %v243, 0
          %vm245 = vcmp.lt.s32.totalorder %v243, 256
          %vm246 = vmand %vm244, %vm245
          %247 = vst.msk [vmem:[#allocation2] sm:$0x3] %vm246, 0.0
          %248 = vst.msk [vmem:[#allocation3] sm:$0x3] %vm246, 0.0
        $region40: #{tpu_custom_call.1} parent=27 // pred_fallthru
          _
        %v249 = vld [vmem:[%s200] sm:$0x3]
        %v250 = vlaneseq
        %v251 = vand.u32 %v250, 127
        %v252 = vadd.s32 %v251, 128
        %s253 = smul.u32 %s28, 256
        %v254 = vstv %s253
        %v255 = vadd.s32 %v254, %v251
        %v256 = vadd.s32 %v254, %v252
        %vm257 = vcmp.lt.s32.totalorder %v255, 256
        %vm258 = vcmp.lt.s32.totalorder %v256, 256
        %vm259 = vcmp.ne.s32.totalorder %v249, 255
        %v260 = vsel %vm257, 1, 0
        %v261 = vsel %vm258, 1, 0
        %v262 = vcombine.low %v260, %v261
        %v264 = vunpack.c.l.s4 1966171168
        %v265 = vunpack.c.0.s8 %v264
        %v266 = vlaneseq
        %v267 = vshrl.u32 %v266, 7
        %v268 = vsub.s32 %v265, %v267
        %v269 = vrot.slane %v262, %v268
        %v271 = vunpack.c.l.s4 1966171168
        %v272 = vunpack.c.0.s8 %v271
        %v273 = vlaneseq
        %v274 = vshrl.u32 %v273, 7
        %v275 = vsub.s32 %v272, %v274
        %v276 = vrot.slane %v269, %v275
        %vm277 = vcmp.ne.s32.totalorder %v276, 0
        %vm278 = vmand %vm259, %vm277
        %v279 = vld [vmem:[%s209] sm:$0xff]
        %v281 = vcombine.high %v279, %v279
        %vm283 = vcmask 1043456
        %v284 = vsel %vm283, %v279, -inf
        %v285 = vrot.slane %v284, 4
        %v286 = vmax.f32 %v284, %v285
        %v287 = vrot.slane %v286, 2
        %v288 = vmax.f32 %v286, %v287
        %v289 = vrot.slane %v288, 1
        %v290 = vmax.f32 %v288, %v289
        %v291 = vsel %vm283, %v281, -inf
        %v292 = vrot.slane %v291, 4
        %v293 = vmax.f32 %v291, %v292
        %v294 = vrot.slane %v293, 2
        %v295 = vmax.f32 %v293, %v294
        %v296 = vrot.slane %v295, 1
        %v297 = vmax.f32 %v295, %v296
        %v300 = vcombine.low %v290, %v297
        %v302 = vsub.f32 %v279, %v300
        %v303 = vmul.f32 %v302, 1.442695
        %v304 = vpow.pop %v303
        %v306 = vcombine.high %v304, %v304
        %v308 = vsel %vm283, %v304, 0.0
        %v309 = vrot.slane %v308, 4
        %v310 = vadd.f32 %v308, %v309
        %v311 = vrot.slane %v310, 2
        %v312 = vadd.f32 %v310, %v311
        %v313 = vrot.slane %v312, 1
        %v314 = vadd.f32 %v312, %v313
        %v315 = vsel %vm283, %v306, 0.0
        %v316 = vrot.slane %v315, 4
        %v317 = vadd.f32 %v315, %v316
        %v318 = vrot.slane %v317, 2
        %v319 = vadd.f32 %v317, %v318
        %v320 = vrot.slane %v319, 1
        %v321 = vadd.f32 %v319, %v320
        %v322 = vlog2.pop %v314
        %v323 = vmul.f32 %v322, 0.6931472
        %v324 = vlog2.pop %v321
        %v325 = vmul.f32 %v324, 0.6931472
        %v326 = vlaneseq
        %v327 = vshrl.u32 %v326, 7
        %v328 = vlaneseq
        %v329 = vshrl.u32 %v328, 7
        %v330 = vsub.s32 0, %v329
        %v331 = vrot.slane %v249, %v330
        %v332 = vlaneseq
        %v333 = vshrl.u32 %v332, 7
        %v334 = vsub.s32 1, %v333
        %v335 = vrot.slane %v249, %v334
        %vm336 = vcmp.eq.s32.totalorder %v327, %v331
        %vm337 = vcmp.eq.s32.totalorder %v327, %v335
        %v339 = vcombine.high %v302, %v302
        %v341 = vsel %vm336, %v302, 0.0
        %v342 = vsel %vm337, %v339, 0.0
        %v343 = vsel %vm283, %v341, 0.0
        %v344 = vrot.slane %v343, 4
        %v345 = vadd.f32 %v343, %v344
        %v346 = vrot.slane %v345, 2
        %v347 = vadd.f32 %v345, %v346
        %v348 = vrot.slane %v347, 1
        %v349 = vadd.f32 %v347, %v348
        %v350 = vsel %vm283, %v342, 0.0
        %v351 = vrot.slane %v350, 4
        %v352 = vadd.f32 %v350, %v351
        %v353 = vrot.slane %v352, 2
        %v354 = vadd.f32 %v352, %v353
        %v355 = vrot.slane %v354, 1
        %v356 = vadd.f32 %v354, %v355
        %v357 = vsub.f32 %v323, %v349
        %v358 = vsub.f32 %v325, %v356
        %v359 = vadd.f32 %v357, 0.0
        %v360 = vadd.f32 %v358, 0.0
        %v361 = vld [vmem:[#allocation2] sm:$0x3]
        %v364 = vcombine.low %v359, %v360
        %v366 = vunpack.c.l.s4 1966171168
        %v367 = vunpack.c.0.s8 %v366
        %v368 = vlaneseq
        %v369 = vshrl.u32 %v368, 7
        %v370 = vsub.s32 %v367, %v369
        %v371 = vrot.slane %v364, %v370
        %v373 = vunpack.c.l.s4 1966171168
        %v374 = vunpack.c.0.s8 %v373
        %v375 = vlaneseq
        %v376 = vshrl.u32 %v375, 7
        %v377 = vsub.s32 %v374, %v376
        %v378 = vrot.slane %v371, %v377
        %v380 = vsel %vm278, %v378, 0.0
        %v381 = vadd.f32 %v361, %v380
        %v382 = vlaneseq
        %vm383 = vcmp.ge.s32.totalorder %v382, 0
        %vm384 = vcmp.lt.s32.totalorder %v382, 256
        %vm385 = vmand %vm383, %vm384
        %386 = vst.msk [vmem:[#allocation2] sm:$0x3] %vm385, %v381
        %v387 = vld [vmem:[#allocation3] sm:$0x3]
        %v388 = vsel %vm278, 1, 0
        %v389 = vcvt.s32.f32 %v388
        %v390 = vadd.f32 %v387, %v389
        %391 = vst.msk [vmem:[#allocation3] sm:$0x3] %vm385, %v390
        // Predicated region
        $region41: #{tpu_custom_call.1} parent=27 // pred_check
          _
        $region42: #{tpu_custom_call.1} parent=27 // pred_check_branch
          %393 = sbr.rel (%p239) target = $region44
        $region43: #{tpu_custom_call.1} parent=27 // pred_region
          %v394 = vld [vmem:[#allocation2] sm:$0x3]
          %v396 = vlaneseq
          %v397 = vshrl.u32 %v396, 7
          %v398 = vsub.s32 0, %v397
          %v399 = vrot.slane %v394, %v398
          %v400 = vlaneseq
          %v401 = vshrl.u32 %v400, 7
          %v402 = vsub.s32 1, %v401
          %v403 = vrot.slane %v394, %v402
          %vm406 = vcmask 1040384
          %v407 = vsel %vm406, %v399, 0.0
          %v408 = vsel %vm406, %v403, 0.0
          %v409 = vadd.f32 %v407, %v408
          %410 = vadd.xlane.f32.xlu0 %v409
          %v411 = vpop.xlane.xlu0 %410
          %v412 = vrot.slane %v411, 4
          %v413 = vadd.f32 %v411, %v412
          %v414 = vrot.slane %v413, 2
          %v415 = vadd.f32 %v413, %v414
          %v416 = vrot.slane %v415, 1
          %v417 = vadd.f32 %v415, %v416
          %s418 = vtos %v417
          %v419 = vstv %s418
          %vm420 = vcmask 0
          %421 = vst.msk [vmem:[#allocation9] sm:$0x1] %vm420, %v419
          %v422 = vld [vmem:[#allocation3] sm:$0x3]
          %v424 = vlaneseq
          %v425 = vshrl.u32 %v424, 7
          %v426 = vsub.s32 0, %v425
          %v427 = vrot.slane %v422, %v426
          %v428 = vlaneseq
          %v429 = vshrl.u32 %v428, 7
          %v430 = vsub.s32 1, %v429
          %v431 = vrot.slane %v422, %v430
          %v434 = vsel %vm406, %v427, 0.0
          %v435 = vsel %vm406, %v431, 0.0
          %v436 = vadd.f32 %v434, %v435
          %437 = vadd.xlane.f32.xlu0 %v436
          %v438 = vpop.xlane.xlu0 %437
          %v439 = vrot.slane %v438, 4
          %v440 = vadd.f32 %v438, %v439
          %v441 = vrot.slane %v440, 2
          %v442 = vadd.f32 %v440, %v441
          %v443 = vrot.slane %v442, 1
          %v444 = vadd.f32 %v442, %v443
          %s445 = vtos %v444
          %v446 = vstv %s445
          %447 = vst.msk [vmem:[#allocation10] sm:$0x1] %vm420, %v446
        $region44: #{tpu_custom_call.1} parent=27 // pred_fallthru
          _
        // Predicated region
        $region45: #{tpu_custom_call.1} parent=27 // pred_check
          %p448 = pneg %p104
        $region46: #{tpu_custom_call.1} parent=27 // pred_check_branch
          %450 = sbr.rel (%p448) target = $region48
        $region47: #{tpu_custom_call.1} parent=27 // pred_region
          %s452 = ssub.s32 16, 16
          %453 = vsyncadd [#allocation6], %s452
          %s455 = sshll.u32 [#allocation9], 4
          %s456 = int_to_ptr.vmem [resolvable:$true] %s455
          %458 = dma.vmem_to_hbm [thread:$0]  %s456, 16, %s2, [#allocation6]
        $region48: #{tpu_custom_call.1} parent=27 // pred_fallthru
          _
        // Predicated region
        $region49: #{tpu_custom_call.1} parent=27 // pred_check
          %p459 = pneg %p125
        $region50: #{tpu_custom_call.1} parent=27 // pred_check_branch
          %461 = sbr.rel (%p459) target = $region52
        $region51: #{tpu_custom_call.1} parent=27 // pred_region
          %s463 = ssub.s32 16, 16
          %464 = vsyncadd [#allocation11], %s463
          %s466 = sshll.u32 [#allocation10], 4
          %s467 = int_to_ptr.vmem [resolvable:$true] %s466
          %469 = dma.vmem_to_hbm [thread:$0]  %s467, 16, %s3, [#allocation11]
        $region52: #{tpu_custom_call.1} parent=27 // pred_fallthru
          _
        // Predicated region
        $region53: #{tpu_custom_call.1} parent=27 // pred_check
          %p470 = pneg %p104
        $region54: #{tpu_custom_call.1} parent=27 // pred_check_branch
          %472 = sbr.rel (%p470) target = $region56
        $region55: #{tpu_custom_call.1} parent=27 // pred_region
          %473 = dma.done [#allocation6], 16
        $region56: #{tpu_custom_call.1} parent=27 // pred_fallthru
          _
        // Predicated region
        $region57: #{tpu_custom_call.1} parent=27 // pred_check
          %p474 = pneg %p125
        $region58: #{tpu_custom_call.1} parent=27 // pred_check_branch
          %476 = sbr.rel (%p474) target = $region60
        $region59: #{tpu_custom_call.1} parent=27 // pred_region
          %477 = dma.done [#allocation11], 16
        $region60: #{tpu_custom_call.1} parent=27 // pred_fallthru
          _
      $region28: #{tpu_custom_call.1} parent=5 // pred_fallthru
        _
      %p478 = scmp.le.s32.totalorder 2, %s18
      // Predicated region
      $region61: #{tpu_custom_call.1} parent=5 // pred_check
        %p479 = pneg %p478
      $region62: #{tpu_custom_call.1} parent=5 // pred_check_branch
        %481 = sbr.rel (%p479) target = $region64
      $region63: #{tpu_custom_call.1} parent=5 // pred_region
        %s482 = ssub.s32 %s18, 2
      $region64: #{tpu_custom_call.1} parent=5 // pred_fallthru
        _
    $region6: #{tpu_custom_call.1} parent=1 // loop_footer
      %s22 = sadd.s32 1, %s18
    $region7: #{tpu_custom_call.1} parent=1 // loop_footer_branch
      %17 = sbr.rel target = $region3
    $region8: #{tpu_custom_call.1} parent=1 // loop_exit
      _
    %483 = vsyncpa [#allocation5], 1
    %s484 = scalar_lea.sflag [#allocation5], 1
    %485 = vsyncpa %s484, 1
    %486 = vsyncpa [#allocation8], 1
    %s487 = scalar_lea.sflag [#allocation8], 1
    %488 = vsyncpa %s487, 1
    %489 = vsyncpa [#allocation6], 1
    %s490 = scalar_lea.sflag [#allocation6], 1
    %491 = vsyncpa %s490, 1
    %492 = vsyncpa [#allocation11], 1

</llo_original>
